<compile_context>
chip_gen: v5e
topology: v5e:2x2
jax: 0.10.0
libtpu: 0.0.40
codegen_flags: <defaults>
</compile_context>

<pallas_src>
import jax
import jax.numpy as jnp
from jax.experimental import pallas as pl
from jax.experimental.pallas import tpu as pltpu


def _round_up(x, m):
    return ((x + m - 1) // m) * m


def _cdiv(a, b):
    return (a + b - 1) // b


def adapter_kernel(scale_ref, x_ref, w_ref, protT_ref, logits_ref, featsn_ref, acc_ref):
    # Grid: (batch tiles, F-contraction tiles). acc_ref is the resident f32 accumulator.
    k = pl.program_id(1)

    @pl.when(k == 0)
    def _init():
        acc_ref[...] = jnp.zeros_like(acc_ref)

    # Streaming bf16 feature matmul on the MXU, accumulated in f32.
    acc_ref[...] += jnp.dot(x_ref[...], w_ref[...], preferred_element_type=jnp.float32)

    @pl.when(k == pl.num_programs(1) - 1)
    def _finalize():
        feats = acc_ref[...]                                           # [TB, Dp] f32
        # L2-normalize features (rsqrt -> EUP slot). The tiny floor only guards the
        # zero padding rows; real rows are unaffected (PyTorch uses no epsilon).
        inv_norm = jax.lax.rsqrt(
            jnp.maximum(jnp.sum(feats * feats, axis=-1, keepdims=True), 1e-30))
        feats_norm = feats * inv_norm                                  # [TB, Dp] f32

        # logits = feats_norm @ prots_norm.T * exp(logit_scale)
        # Prototypes arrive pre-normalized, pre-transposed (Dp, Kp) in bf16, so this
        # is a plain MXU matmul; scale multiply stays f32 after accumulation.
        logits = jnp.dot(feats_norm.astype(jnp.bfloat16), protT_ref[...],
                         preferred_element_type=jnp.float32) * scale_ref[0]

        logits_ref[...] = logits
        featsn_ref[...] = feats_norm


def _pick_batch_tile(B):
    if B >= 256:
        return 256                       # matches 256-wide MXU on v6e/v7x
    if B > 8:
        return _round_up(_cdiv(B, 2), 8)  # >=2 batch tiles for v7x's two TensorCores
    return 8


def prepare_adapter_params(w_backbone, prototypes, logit_scale, *, tf=512):
    """One-time (per-model) preparation: padded bf16 weights, normalized+transposed
    bf16 prototypes, exponentiated logit scale. Cache the result across calls."""
    F, D = w_backbone.shape
    K = prototypes.shape[0]

    TF = min(tf, _round_up(F, 128))
    Fp = _round_up(F, TF)
    Dp = _round_up(D, 128)
    Kp = _round_up(K, 128)

    w_p = jnp.pad(w_backbone.astype(jnp.float32),
                  ((0, Fp - F), (0, Dp - D))).astype(jnp.bfloat16)       # [Fp, Dp]

    prots = prototypes.astype(jnp.float32)
    prots_norm = prots * jax.lax.rsqrt(
        jnp.maximum(jnp.sum(prots * prots, axis=-1, keepdims=True), 1e-30))
    protT_p = jnp.pad(prots_norm, ((0, Kp - K), (0, Dp - D))).T.astype(jnp.bfloat16)  # [Dp, Kp]

    scale_exp = jnp.exp(jnp.asarray(logit_scale, jnp.float32)).reshape(1)

    return dict(w_p=w_p, protT_p=protT_p, scale_exp=scale_exp,
                F=F, D=D, K=K, TF=TF, Fp=Fp, Dp=Dp, Kp=Kp)


def adapter_forward(x_nchw, params):
    """x_nchw: [B, C, H, W] float32; params from prepare_adapter_params.
    Returns (logits [B, K] f32, feats_norm [B, D] f32)."""
    B, C, H, W = x_nchw.shape
    F, D, K = params["F"], params["D"], params["K"]
    TF, Fp, Dp, Kp = params["TF"], params["Fp"], params["Dp"], params["Kp"]
    assert C * H * W == F, "input spatial shape inconsistent with backbone weights"

    TB = _pick_batch_tile(B)
    Bp = _round_up(B, TB)

    # Glue: flatten NCHW -> [B, F], zero-pad, cast image operand to bf16 for the MXU.
    x_flat = x_nchw.reshape(B, F).astype(jnp.float32)
    x_p = jnp.pad(x_flat, ((0, Bp - B), (0, Fp - F))).astype(jnp.bfloat16)

    w_p = params["w_p"]
    protT_p = params["protT_p"]
    scale_exp = params["scale_exp"]

    n_btiles = Bp // TB
    n_ftiles = Fp // TF
    grid = (n_btiles, n_ftiles)

    # VMEM budget per chip generation: ~64 MiB on v5e/v6e (128 MiB physical),
    # ~32 MiB on v7x (64 MiB physical).
    try:
        vmem_cap = int(pltpu.get_tpu_info().vmem_capacity_bytes)
    except Exception:
        vmem_cap = 64 * 1024 * 1024
    vmem_limit = int(min(64 * 1024 * 1024, max(vmem_cap // 2, 16 * 1024 * 1024)))

    # Weight stream is re-read once per batch tile; prototypes/outputs once per tile.
    cost = pl.CostEstimate(
        flops=2 * Bp * Fp * Dp + 2 * Bp * Dp * Kp,
        transcendentals=Bp,
        bytes_accessed=(x_p.size * 2
                        + w_p.size * 2 * n_btiles
                        + protT_p.size * 2 * n_btiles
                        + Bp * Kp * 4 + Bp * Dp * 4),
    )

    logits_p, featsn_p = pl.pallas_call(
        adapter_kernel,
        out_shape=(
            jax.ShapeDtypeStruct((Bp, Kp), jnp.float32),
            jax.ShapeDtypeStruct((Bp, Dp), jnp.float32),
        ),
        grid=grid,
        in_specs=[
            pl.BlockSpec(memory_space=pltpu.MemorySpace.SMEM),   # exp(logit_scale)
            pl.BlockSpec((TB, TF), lambda i, k: (i, k)),         # image feature tiles
            pl.BlockSpec((TF, Dp), lambda i, k: (k, 0)),         # streamed backbone weights
            pl.BlockSpec((Dp, Kp), lambda i, k: (0, 0)),         # normalized prototypes^T
        ],
        out_specs=(
            pl.BlockSpec((TB, Kp), lambda i, k: (i, 0)),         # logits (lane-dense)
            pl.BlockSpec((TB, Dp), lambda i, k: (i, 0)),         # normalized features
        ),
        scratch_shapes=[pltpu.VMEM((TB, Dp), jnp.float32)],      # f32 accumulator
        compiler_params=pltpu.CompilerParams(
            dimension_semantics=("parallel", "arbitrary"),
            vmem_limit_bytes=vmem_limit,
        ),
        cost_estimate=cost,
    )(scale_exp, x_p, w_p, protT_p)

    # Slice off padding.
    return logits_p[:B, :K], featsn_p[:B, :D]


if __name__ == "__main__":
    # Small shapes consistent with the forward pass:
    #   images [B=2, C=3, H=16, W=16], embed dim D=32, num classes K=8.
    B, C, H, W = 2, 3, 16, 16
    D, K = 32, 8
    F = C * H * W

    key = jax.random.PRNGKey(0)
    k_x, k_w, k_prot = jax.random.split(key, 3)

    x = jax.random.normal(k_x, (B, C, H, W), dtype=jnp.float32)
    # Deterministic synthetic backbone projection weights.
    w_backbone = jax.random.normal(k_w, (F, D), dtype=jnp.float32) * (1.0 / jnp.sqrt(F))
    # Deterministic "zero-shot" text prototypes (template_index slice of text_embeddings).
    zero_shot_prot = jax.random.normal(k_prot, (K, D), dtype=jnp.float32)
    # CLIP default logit_scale init: log(1 / 0.07).
    logit_scale = jnp.log(jnp.float32(1.0 / 0.07))

    params = prepare_adapter_params(w_backbone, zero_shot_prot, logit_scale, tf=512)
    logits, feats_norm = adapter_forward(x, params)
    jax.block_until_ready((logits, feats_norm))

    # Reference in plain JAX, mirroring the kernel's bf16-operand / f32-accumulate
    # matmuls so the comparison is tight.
    x_flat = x.reshape(B, F)
    feats_ref = jnp.dot(x_flat.astype(jnp.bfloat16), w_backbone.astype(jnp.bfloat16),
                        preferred_element_type=jnp.float32)
    feats_norm_ref = feats_ref / jnp.linalg.norm(feats_ref, axis=-1, keepdims=True)
    prots_norm_ref = zero_shot_prot / jnp.linalg.norm(zero_shot_prot, axis=-1,
                                                      keepdims=True)
    logits_ref = jnp.dot(feats_norm_ref.astype(jnp.bfloat16),
                         prots_norm_ref.astype(jnp.bfloat16).T,
                         preferred_element_type=jnp.float32) * jnp.exp(logit_scale)

    assert logits.shape == (B, K) and feats_norm.shape == (B, D)
    assert jnp.allclose(feats_norm, feats_norm_ref, atol=2e-3, rtol=2e-3), (
        float(jnp.max(jnp.abs(feats_norm - feats_norm_ref))))
    assert jnp.allclose(logits, logits_ref, atol=2e-2, rtol=2e-2), (
        float(jnp.max(jnp.abs(logits - logits_ref))))

    print("KERNEL_OK")
</pallas_src>

<mosaic_0001>
module attributes {stable_mosaic.version = 11 : i64} {
  func.func @adapter_kernel(%arg0: i32, %arg1: i32, %arg2: memref<1xf32, #tpu.memory_space<smem>>, %arg3: memref<8x512xbf16, #tpu.memory_space<vmem>>, %arg4: memref<512x128xbf16, #tpu.memory_space<vmem>>, %arg5: memref<128x128xbf16, #tpu.memory_space<vmem>>, %arg6: memref<8x128xf32, #tpu.memory_space<vmem>>, %arg7: memref<8x128xf32, #tpu.memory_space<vmem>>, %arg8: memref<8x128xf32, #tpu.memory_space<vmem>>) attributes {dimension_semantics = [#tpu.dimension_semantics<parallel>, #tpu.dimension_semantics<arbitrary>], iteration_bounds = array<i64: 1, 2>, scalar_prefetch = 0 : i64, scratch_operands = 1 : i64, tpu.core_type = #tpu.core_type<tc>, window_params = [{transform_indices = @transform_0, window_bounds = array<i64: 1>}, {transform_indices = @transform_1, window_bounds = array<i64: 8, 512>}, {transform_indices = @transform_2, window_bounds = array<i64: 512, 128>}, {pipeline_mode = #tpu.pipeline_mode<synchronous>, transform_indices = @transform_3, window_bounds = array<i64: 128, 128>}, {transform_indices = @transform_4, window_bounds = array<i64: 8, 128>}, {transform_indices = @transform_5, window_bounds = array<i64: 8, 128>}]} {
    %c0_i32 = arith.constant 0 : i32
    %0 = arith.cmpi eq, %arg1, %c0_i32 : i32
    %1 = arith.extui %0 : i1 to i32
    %c0_i32_0 = arith.constant 0 : i32
    %2 = arith.cmpi ne, %1, %c0_i32_0 : i32
    scf.if %2 {
      %cst_9 = arith.constant 0.000000e+00 : f32
      %12 = vector.broadcast %cst_9 : f32 to vector<8x128xf32>
      %c0_10 = arith.constant 0 : index
      %c0_11 = arith.constant 0 : index
      %13 = vector.load %arg8[%c0_10, %c0_11] : memref<8x128xf32, #tpu.memory_space<vmem>>, vector<8x128xf32>
      tpu.vector_store %arg8[%c0_10, %c0_11], %12 {strides = array<i32>} : memref<8x128xf32, #tpu.memory_space<vmem>>, vector<8x128xf32>,
    } else {
    }
    %c0 = arith.constant 0 : index
    %c0_1 = arith.constant 0 : index
    %3 = vector.load %arg8[%c0, %c0_1] : memref<8x128xf32, #tpu.memory_space<vmem>>, vector<8x128xf32>
    %c0_2 = arith.constant 0 : index
    %c0_3 = arith.constant 0 : index
    %4 = vector.load %arg3[%c0_2, %c0_3] : memref<8x512xbf16, #tpu.memory_space<vmem>>, vector<8x512xbf16>
    %c0_4 = arith.constant 0 : index
    %c0_5 = arith.constant 0 : index
    %5 = vector.load %arg4[%c0_4, %c0_5] : memref<512x128xbf16, #tpu.memory_space<vmem>>, vector<512x128xbf16>
    %cst = arith.constant dense<0.000000e+00> : vector<8x128xf32>
    %6 = tpu.matmul %4, %5, %cst {dimension_numbers = #tpu.dot_dimension_numbers<[1], [0], [0], [1], [0, 0, 1, 1], [], []>} : vector<8x512xbf16>, vector<512x128xbf16>, vector<8x128xf32> -> vector<8x128xf32>
    %7 = arith.addf %3, %6 : vector<8x128xf32>
    %c0_6 = arith.constant 0 : index
    %c0_7 = arith.constant 0 : index
    %8 = vector.load %arg8[%c0_6, %c0_7] : memref<8x128xf32, #tpu.memory_space<vmem>>, vector<8x128xf32>
    tpu.vector_store %arg8[%c0_6, %c0_7], %7 {strides = array<i32>} : memref<8x128xf32, #tpu.memory_space<vmem>>, vector<8x128xf32>,
    %c1_i32 = arith.constant 1 : i32
    %9 = arith.cmpi eq, %arg1, %c1_i32 : i32
    %10 = arith.extui %9 : i1 to i32
    %c0_i32_8 = arith.constant 0 : i32
    %11 = arith.cmpi ne, %10, %c0_i32_8 : i32
    scf.if %11 {
      %c0_9 = arith.constant 0 : index
      %c0_10 = arith.constant 0 : index
      %12 = vector.load %arg8[%c0_9, %c0_10] : memref<8x128xf32, #tpu.memory_space<vmem>>, vector<8x128xf32>
      %13 = arith.mulf %12, %12 : vector<8x128xf32>
      %cst_11 = arith.constant dense<0.000000e+00> : vector<8xf32>
      %14 = vector.multi_reduction <add>, %13, %cst_11 [1] : vector<8x128xf32> to vector<8xf32>
      %15 = vector.shape_cast %14 : vector<8xf32> to vector<8x1xf32>
      %cst_12 = arith.constant 1.000000e-30 : f32
      %16 = vector.broadcast %cst_12 : f32 to vector<8x1xf32>
      %17 = arith.maximumf %15, %16 : vector<8x1xf32>
      %18 = math.rsqrt %17 : vector<8x1xf32>
      %19 = vector.broadcast %18 : vector<8x1xf32> to vector<8x128xf32>
      %20 = arith.mulf %12, %19 : vector<8x128xf32>
      %21 = arith.truncf %20 : vector<8x128xf32> to vector<8x128xbf16>
      %c0_13 = arith.constant 0 : index
      %c0_14 = arith.constant 0 : index
      %22 = vector.load %arg5[%c0_13, %c0_14] : memref<128x128xbf16, #tpu.memory_space<vmem>>, vector<128x128xbf16>
      %cst_15 = arith.constant dense<0.000000e+00> : vector<8x128xf32>
      %23 = tpu.matmul %21, %22, %cst_15 {dimension_numbers = #tpu.dot_dimension_numbers<[1], [0], [0], [1], [0, 0, 1, 1], [], []>} : vector<8x128xbf16>, vector<128x128xbf16>, vector<8x128xf32> -> vector<8x128xf32>
      %c0_16 = arith.constant 0 : index
      %24 = memref.load %arg2[%c0_16] : memref<1xf32, #tpu.memory_space<smem>>
      %25 = vector.broadcast %24 : f32 to vector<8x128xf32>
      %26 = arith.mulf %23, %25 : vector<8x128xf32>
      %c0_17 = arith.constant 0 : index
      %c0_18 = arith.constant 0 : index
      %27 = vector.load %arg6[%c0_17, %c0_18] : memref<8x128xf32, #tpu.memory_space<vmem>>, vector<8x128xf32>
      tpu.vector_store %arg6[%c0_17, %c0_18], %26 {strides = array<i32>} : memref<8x128xf32, #tpu.memory_space<vmem>>, vector<8x128xf32>,
      %c0_19 = arith.constant 0 : index
      %c0_20 = arith.constant 0 : index
      %28 = vector.load %arg7[%c0_19, %c0_20] : memref<8x128xf32, #tpu.memory_space<vmem>>, vector<8x128xf32>
      tpu.vector_store %arg7[%c0_19, %c0_20], %20 {strides = array<i32>} : memref<8x128xf32, #tpu.memory_space<vmem>>, vector<8x128xf32>,
    } else {
    }
    return
  }
  func.func @transform_0(%arg0: i32, %arg1: i32) -> i32 {
    %c0_i32 = arith.constant 0 : i32
    %c0_i32_0 = arith.constant 0 : i32
    return %c0_i32 : i32
  }
  func.func @transform_1(%arg0: i32, %arg1: i32) -> (i32, i32) {
    %c0_i32 = arith.constant 0 : i32
    return %arg0, %arg1 : i32, i32
  }
  func.func @transform_2(%arg0: i32, %arg1: i32) -> (i32, i32) {
    %c0_i32 = arith.constant 0 : i32
    %c0_i32_0 = arith.constant 0 : i32
    return %arg1, %c0_i32 : i32, i32
  }
  func.func @transform_3(%arg0: i32, %arg1: i32) -> (i32, i32) {
    %c0_i32 = arith.constant 0 : i32
    %c0_i32_0 = arith.constant 0 : i32
    %c0_i32_1 = arith.constant 0 : i32
    return %c0_i32, %c0_i32_0 : i32, i32
  }
  func.func @transform_4(%arg0: i32, %arg1: i32) -> (i32, i32) {
    %c0_i32 = arith.constant 0 : i32
    %c0_i32_0 = arith.constant 0 : i32
    return %arg0, %c0_i32 : i32, i32
  }
  func.func @transform_5(%arg0: i32, %arg1: i32) -> (i32, i32) {
    %c0_i32 = arith.constant 0 : i32
    %c0_i32_0 = arith.constant 0 : i32
    return %arg0, %c0_i32 : i32, i32
  }
}

</mosaic_0001>

<llo_original>
// kernel: tpu_custom_call.1
$region0: #{tpu_custom_call.1}
  #allocation0 [shape = 'u32[]', space=smem, size = 0x4, offset = 0x4, fixed_abs, tag = 'smem constant byte address 0x4 - core index']
  #allocation1 [shape = 'u32[72,128]{1,0:T(1,128)}', space=vmem, size = 0x9000, scoped, tag = 'internal scratch']
  #allocation2 [shape = 'f32[8,128]{1,0:T(8,128)}', space=vmem, size = 0x1000, scoped, tag = 'scratch operand']
  #allocation3 [shape = 'f32[1]{0:T(128)S(6)}', space=smem, size = 0x200, scoped, tag = 'scoped memory for tpu_custom_call.1']
  %s0 = inlined_call_operand.<no memory space> [shape: f32[1], index: 0, kind: input, shape index: {}]
  %s1 = inlined_call_operand.hbm [shape: bf16[8,1024], index: 1, kind: input, shape index: {}]
  %s2 = inlined_call_operand.hbm [shape: bf16[1024,128], index: 2, kind: input, shape index: {}]
  %s3 = inlined_call_operand.hbm [shape: bf16[128,128], index: 3, kind: input, shape index: {}]
  %s4 = inlined_call_operand.hbm [shape: f32[8,128], index: 4, kind: output, shape index: {0}]
  %s5 = inlined_call_operand.hbm [shape: f32[8,128], index: 5, kind: output, shape index: {1}]
  %6 = xla_tuple %s4, %s5
  %s7 = sld [smem:[#allocation0]]
  $region77: #{tpu_custom_call.1} parent=0
    _
  %s9 = ssub.s32 1, %s7
  %s10 = scalar_select 0, %s9, %s7
  %11 = sst [smem:[#allocation3]] %s0
  $region1: #{tpu_custom_call.1} parent=0
    #allocation4 [shape = 'u8[16384]{0}', space=vmem, size = 0x4000, scoped, tag = 'input window, operand 1']
    #allocation5 [shape = 's32[2]{0}', space=sflag, size = 0x8, scoped, tag = 'scoped memory for tpu_custom_call.1']
    #allocation6 [shape = 's32[2]{0}', space=sflag, size = 0x8, scoped, tag = 'scoped memory for tpu_custom_call.1']
    #allocation7 [shape = 'u8[262144]{0}', space=vmem, size = 0x40000, scoped, tag = 'input window, operand 2']
    #allocation8 [shape = 's32[2]{0}', space=sflag, size = 0x8, scoped, tag = 'scoped memory for tpu_custom_call.1']
    #allocation9 [shape = 'u8[32768]{0}', space=vmem, size = 0x8000, scoped, tag = 'input window, operand 3, single buffered']
    #allocation10 [shape = 'u8[4096]{0}', space=vmem, size = 0x1000, scoped, tag = 'output window, operand 0, single buffered']
    #allocation11 [shape = 'u8[4096]{0}', space=vmem, size = 0x1000, scoped, tag = 'output window, operand 1, single buffered']
    #allocation12 [shape = 's32[1]{0}', space=sflag, size = 0x4, scoped, tag = 'scoped memory for tpu_custom_call.1']
    %12 = vsyncpa [#allocation5], 0
    %s13 = scalar_lea.sflag [#allocation5], 1
    %14 = vsyncpa %s13, 0
    %15 = vsyncpa [#allocation8], 0
    %s16 = scalar_lea.sflag [#allocation8], 1
    %17 = vsyncpa %s16, 0
    %18 = vsyncpa [#allocation6], 0
    %19 = vsyncpa [#allocation12], 0
    loop: start=0, step=1, limit=4
    $region2: #{tpu_custom_call.1} parent=1 // loop_pre_header
      _
    $region3: #{tpu_custom_call.1} parent=1 // loop_header
      %s21 = sphi 0, %s25
      %p22 = scmp.ge.s32.totalorder %s21, 4
      %s28 = sphi 0, %s40
      %s29 = sphi 0, %s36
      %s30 = sphi 0, %s28
      %s31 = sphi 0, %s29
      %s32 = sphi 0, %s30
      %s33 = sphi 0, %s31
      %s41 = sphi 0, %s41
      %s43 = sphi 0, %s41
      %s44 = sphi 0, %s43
      %s58 = sphi 0, %s44
      %s66 = sphi 0, %s68
      %s69 = sphi 0, %s66
      %s70 = sphi 0, %s69
      %s86 = sphi 0, %s70
      %s92 = sphi 0, %s94
      %s95 = sphi 0, %s92
      %s96 = sphi 0, %s95
      %s112 = sphi 0, %s96
      %s116 = sphi 0, %s116
      %s118 = sphi 0, %s116
      %s119 = sphi 0, %s118
      %s133 = sphi 0, %s119
      %s139 = sphi 0, %s141
      %s142 = sphi 0, %s139
      %s143 = sphi 0, %s142
      %s159 = sphi 0, %s143
      %s165 = sphi 0, %s167
      %s168 = sphi 0, %s165
      %s169 = sphi 0, %s168
      %s185 = sphi 0, %s169
    $region4: #{tpu_custom_call.1} parent=1 // loop_header_branch
      %24 = sbr.rel (%p22) target = $region8
    $region5: #{tpu_custom_call.1} parent=1 // loop_body
      %s26 = ssub.s32 %s21, 1
      %s27 = ssub.s32 %s21, 2
      %s34 = sadd.s32 1, %s29
      %p35 = scmp.ge.s32.totalorder %s34, 2
      %s36 = scalar_select %p35, 0, %s34
      %s37 = sadd.s32 1, %s28
      %s38 = scalar_select %p35, %s37, %s28
      %p39 = scmp.ge.s32.totalorder %s38, 1
      %s40 = scalar_select %p39, 0, %s38
      %s42 = sadd.s32 %s41, 1
      %p45 = scmp.eq.s32.totalorder %s21, 1
      %p46 = scmp.ne.s32.totalorder %s41, %s43
      %p47 = scmp.eq.s32.totalorder %s21, 0
      %p48 = por %p46, %p47
      %p49 = scmp.ne.s32.totalorder %s41, %s43
      %p50 = scmp.eq.s32.totalorder %s26, 1
      %p51 = por %p49, %p50
      %p52 = scmp.ne.s32.totalorder %s43, %s44
      %p53 = scmp.eq.s32.totalorder %s26, 0
      %p54 = por %p52, %p53
      %p55 = scmp.ne.s32.totalorder %s43, %s44
      %p56 = scmp.eq.s32.totalorder %s27, 1
      %p57 = por %p55, %p56
      %p59 = scmp.ne.s32.totalorder %s44, %s58
      %p60 = scmp.eq.s32.totalorder %s27, 0
      %p61 = por %p59, %p60
      %s62 = ssub.s32 %s28, %s40
      %s63 = ssub.s32 %s29, %s36
      %s64 = sor.u32 %s62, %s63
      %p65 = scmp.eq.s32.totalorder %s64, 0
      %s67 = sadd.s32 %s66, 1
      %s68 = scalar_select %p65, %s66, %s67
      %p71 = pneg %p65
      %p72 = scmp.eq.s32.totalorder %s21, 1
      %p73 = por %p71, %p72
      %p74 = scmp.ne.s32.totalorder %s66, %s69
      %p75 = scmp.eq.s32.totalorder %s21, 0
      %p76 = por %p74, %p75
      %p77 = scmp.ne.s32.totalorder %s66, %s69
      %p78 = scmp.eq.s32.totalorder %s26, 1
      %p79 = por %p77, %p78
      %p80 = scmp.ne.s32.totalorder %s69, %s70
      %p81 = scmp.eq.s32.totalorder %s26, 0
      %p82 = por %p80, %p81
      %p83 = scmp.ne.s32.totalorder %s69, %s70
      %p84 = scmp.eq.s32.totalorder %s27, 1
      %p85 = por %p83, %p84
      %p87 = scmp.ne.s32.totalorder %s70, %s86
      %p88 = scmp.eq.s32.totalorder %s27, 0
      %p89 = por %p87, %p88
      %s90 = ssub.s32 %s29, %s36
      %p91 = scmp.eq.s32.totalorder %s90, 0
      %s93 = sadd.s32 %s92, 1
      %s94 = scalar_select %p91, %s92, %s93
      %p97 = pneg %p91
      %p98 = scmp.eq.s32.totalorder %s21, 1
      %p99 = por %p97, %p98
      %p100 = scmp.ne.s32.totalorder %s92, %s95
      %p101 = scmp.eq.s32.totalorder %s21, 0
      %p102 = por %p100, %p101
      %p103 = scmp.ne.s32.totalorder %s92, %s95
      %p104 = scmp.eq.s32.totalorder %s26, 1
      %p105 = por %p103, %p104
      %p106 = scmp.ne.s32.totalorder %s95, %s96
      %p107 = scmp.eq.s32.totalorder %s26, 0
      %p108 = por %p106, %p107
      %p109 = scmp.ne.s32.totalorder %s95, %s96
      %p110 = scmp.eq.s32.totalorder %s27, 1
      %p111 = por %p109, %p110
      %p113 = scmp.ne.s32.totalorder %s96, %s112
      %p114 = scmp.eq.s32.totalorder %s27, 0
      %p115 = por %p113, %p114
      %s117 = sadd.s32 %s116, 1
      %p120 = scmp.eq.s32.totalorder %s21, 1
      %p121 = scmp.ne.s32.totalorder %s116, %s118
      %p122 = scmp.eq.s32.totalorder %s21, 0
      %p123 = por %p121, %p122
      %p124 = scmp.ne.s32.totalorder %s116, %s118
      %p125 = scmp.eq.s32.totalorder %s26, 1
      %p126 = por %p124, %p125
      %p127 = scmp.ne.s32.totalorder %s118, %s119
      %p128 = scmp.eq.s32.totalorder %s26, 0
      %p129 = por %p127, %p128
      %p130 = scmp.ne.s32.totalorder %s118, %s119
      %p131 = scmp.eq.s32.totalorder %s27, 1
      %p132 = por %p130, %p131
      %p134 = scmp.ne.s32.totalorder %s119, %s133
      %p135 = scmp.eq.s32.totalorder %s27, 0
      %p136 = por %p134, %p135
      %s137 = ssub.s32 %s28, %s40
      %p138 = scmp.eq.s32.totalorder %s137, 0
      %s140 = sadd.s32 %s139, 1
      %s141 = scalar_select %p138, %s139, %s140
      %p144 = pneg %p138
      %p145 = scmp.eq.s32.totalorder %s21, 1
      %p146 = por %p144, %p145
      %p147 = scmp.ne.s32.totalorder %s139, %s142
      %p148 = scmp.eq.s32.totalorder %s21, 0
      %p149 = por %p147, %p148
      %p150 = scmp.ne.s32.totalorder %s139, %s142
      %p151 = scmp.eq.s32.totalorder %s26, 1
      %p152 = por %p150, %p151
      %p153 = scmp.ne.s32.totalorder %s142, %s143
      %p154 = scmp.eq.s32.totalorder %s26, 0
      %p155 = por %p153, %p154
      %p156 = scmp.ne.s32.totalorder %s142, %s143
      %p157 = scmp.eq.s32.totalorder %s27, 1
      %p158 = por %p156, %p157
      %p160 = scmp.ne.s32.totalorder %s143, %s159
      %p161 = scmp.eq.s32.totalorder %s27, 0
      %p162 = por %p160, %p161
      %s163 = ssub.s32 %s28, %s40
      %p164 = scmp.eq.s32.totalorder %s163, 0
      %s166 = sadd.s32 %s165, 1
      %s167 = scalar_select %p164, %s165, %s166
      %p170 = pneg %p164
      %p171 = scmp.eq.s32.totalorder %s21, 1
      %p172 = por %p170, %p171
      %p173 = scmp.ne.s32.totalorder %s165, %s168
      %p174 = scmp.eq.s32.totalorder %s21, 0
      %p175 = por %p173, %p174
      %p176 = scmp.ne.s32.totalorder %s165, %s168
      %p177 = scmp.eq.s32.totalorder %s26, 1
      %p178 = por %p176, %p177
      %p179 = scmp.ne.s32.totalorder %s168, %s169
      %p180 = scmp.eq.s32.totalorder %s26, 0
      %p181 = por %p179, %p180
      %p182 = scmp.ne.s32.totalorder %s168, %s169
      %p183 = scmp.eq.s32.totalorder %s27, 1
      %p184 = por %p182, %p183
      %p186 = scmp.ne.s32.totalorder %s169, %s185
      %p187 = scmp.eq.s32.totalorder %s27, 0
      %p188 = por %p186, %p187
      %p189 = scmp.le.s32.totalorder 1, %s21
      %p190 = scmp.lt.s32.totalorder %s21, 3
      %p191 = pnand %p189, %p190
      %p192 = pneg %p191
      // Predicated region
      $region9: #{tpu_custom_call.1} parent=5 // pred_check
        _
      $region10: #{tpu_custom_call.1} parent=5 // pred_check_branch
        %194 = sbr.rel (%p191) target = $region12
      $region11: #{tpu_custom_call.1} parent=5 // pred_region
        %s195 = ssub.s32 %s21, 1
        // Predicated region
        $region13: #{tpu_custom_call.1} parent=11 // pred_check
          %p196 = pneg %p54
        $region14: #{tpu_custom_call.1} parent=11 // pred_check_branch
          %198 = sbr.rel (%p196) target = $region16
        $region15: #{tpu_custom_call.1} parent=11 // pred_region
          _
        $region16: #{tpu_custom_call.1} parent=11 // pred_fallthru
          _
        // Predicated region
        $region17: #{tpu_custom_call.1} parent=11 // pred_check
          %p199 = pneg %p129
        $region18: #{tpu_custom_call.1} parent=11 // pred_check_branch
          %201 = sbr.rel (%p199) target = $region20
        $region19: #{tpu_custom_call.1} parent=11 // pred_region
          %203 = vsyncadd [#allocation8], 0
          %s204 = sshll.u32 %s3, 4
          %s205 = int_to_ptr.hbm [resolvable:$true] %s204
          %s206 = sshll.u32 [#allocation9], 4
          %s207 = int_to_ptr.vmem [resolvable:$true] %s206
          %212 = dma.hbm_to_vmem [thread:$0]  %s205, 1024, %s207, [#allocation8], 64, 64, 4
        $region20: #{tpu_custom_call.1} parent=11 // pred_fallthru
          _
      $region12: #{tpu_custom_call.1} parent=5 // pred_fallthru
        _
      %p213 = scmp.lt.s32.totalorder %s21, 2
      // Predicated region
      $region21: #{tpu_custom_call.1} parent=5 // pred_check
        %p214 = pneg %p213
      $region22: #{tpu_custom_call.1} parent=5 // pred_check_branch
        %216 = sbr.rel (%p214) target = $region24
      $region23: #{tpu_custom_call.1} parent=5 // pred_region
        // Predicated region
        $region25: #{tpu_custom_call.1} parent=23 // pred_check
          %p217 = pneg %p76
        $region26: #{tpu_custom_call.1} parent=23 // pred_check_branch
          %219 = sbr.rel (%p217) target = $region28
        $region27: #{tpu_custom_call.1} parent=23 // pred_region
          %s220 = sand.u32 %s66, 1
          %s221 = scalar_lea.sflag [#allocation5], %s220
          %s222 = sand.u32 %s66, 1
          %s223 = smul.addr %s222, 16
          %s224 = scalar_lea.vmem [#allocation4], %s223
          %s225 = smul.u32 4, %s29
          %227 = vsyncadd %s221, 0
          %s228 = smul.addr %s28, 8
          %s229 = sadd.s32 %s225, %s228
          %s230 = smul.addr %s229, 4
          %s231 = scalar_lea.hbm %s1, %s230
          %s233 = sshll.u32 %s231, 4
          %s234 = int_to_ptr.hbm [resolvable:$true] %s233
          %s235 = sshll.u32 %s224, 4
          %s236 = int_to_ptr.vmem [resolvable:$true] %s235
          %238 = dma.hbm_to_vmem [thread:$0]  %s234, 256, %s236, %s221
        $region28: #{tpu_custom_call.1} parent=23 // pred_fallthru
          _
        // Predicated region
        $region29: #{tpu_custom_call.1} parent=23 // pred_check
          %p239 = pneg %p102
        $region30: #{tpu_custom_call.1} parent=23 // pred_check_branch
          %241 = sbr.rel (%p239) target = $region32
        $region31: #{tpu_custom_call.1} parent=23 // pred_region
          %s242 = sand.u32 %s21, 1
          %s243 = scalar_lea.sflag [#allocation8], %s242
          %s244 = sand.u32 %s92, 1
          %s245 = smul.addr %s244, 256
          %s246 = scalar_lea.vmem [#allocation7], %s245
          %s247 = smul.u32 64, %s29
          %249 = vsyncadd %s243, 0
          %s250 = smul.addr %s247, 4
          %s251 = scalar_lea.hbm %s2, %s250
          %s252 = sshll.u32 %s251, 4
          %s253 = int_to_ptr.hbm [resolvable:$true] %s252
          %s254 = sshll.u32 %s246, 4
          %s255 = int_to_ptr.vmem [resolvable:$true] %s254
          %260 = dma.hbm_to_vmem [thread:$0]  %s253, 4096, %s255, %s243, 64, 64, 4
        $region32: #{tpu_custom_call.1} parent=23 // pred_fallthru
          _
      $region24: #{tpu_custom_call.1} parent=5 // pred_fallthru
        _
      %p261 = scmp.le.s32.totalorder 1, %s21
      %p262 = scmp.lt.s32.totalorder %s21, 3
      %p263 = pnand %p261, %p262
      %p264 = pneg %p263
      // Predicated region
      $region33: #{tpu_custom_call.1} parent=5 // pred_check
        _
      $region34: #{tpu_custom_call.1} parent=5 // pred_check_branch
        %266 = sbr.rel (%p263) target = $region36
      $region35: #{tpu_custom_call.1} parent=5 // pred_region
        %s267 = ssub.s32 %s21, 1
        %s268 = sand.u32 %s69, 1
        %s269 = scalar_lea.sflag [#allocation5], %s268
        %s270 = sand.u32 %s69, 1
        %s271 = smul.addr %s270, 16
        %s272 = scalar_lea.vmem [#allocation4], %s271
        // Predicated region
        $region37: #{tpu_custom_call.1} parent=35 // pred_check
          %p273 = pneg %p82
        $region38: #{tpu_custom_call.1} parent=35 // pred_check_branch
          %275 = sbr.rel (%p273) target = $region40
        $region39: #{tpu_custom_call.1} parent=35 // pred_region
          %277 = dma.done %s269, 256
        $region40: #{tpu_custom_call.1} parent=35 // pred_fallthru
          _
        %s278 = sand.u32 %s26, 1
        %s279 = scalar_lea.sflag [#allocation8], %s278
        %s280 = sand.u32 %s95, 1
        %s281 = smul.addr %s280, 256
        %s282 = scalar_lea.vmem [#allocation7], %s281
        // Predicated region
        $region41: #{tpu_custom_call.1} parent=35 // pred_check
          %p283 = pneg %p108
        $region42: #{tpu_custom_call.1} parent=35 // pred_check_branch
          %285 = sbr.rel (%p283) target = $region44
        $region43: #{tpu_custom_call.1} parent=35 // pred_region
          %287 = dma.done %s279, 4096
        $region44: #{tpu_custom_call.1} parent=35 // pred_fallthru
          _
        // Predicated region
        $region45: #{tpu_custom_call.1} parent=35 // pred_check
          %p288 = pneg %p129
        $region46: #{tpu_custom_call.1} parent=35 // pred_check_branch
          %290 = sbr.rel (%p288) target = $region48
        $region47: #{tpu_custom_call.1} parent=35 // pred_region
          %292 = dma.done [#allocation8], 1024
        $region48: #{tpu_custom_call.1} parent=35 // pred_fallthru
          _
        %p293 = pneg %p54
        %p294 = pneg %p51
        %s295 = sand.u32 %s69, 1
        %s296 = scalar_lea.sflag [#allocation5], %s295
        %s297 = sand.u32 %s69, 1
        %s298 = smul.addr %s297, 16
        %s299 = scalar_lea.vmem [#allocation4], %s298
        %p300 = pneg %p82
        %p301 = pneg %p79
        %s302 = sand.u32 %s26, 1
        %s303 = scalar_lea.sflag [#allocation8], %s302
        %s304 = sand.u32 %s95, 1
        %s305 = smul.addr %s304, 256
        %s306 = scalar_lea.vmem [#allocation7], %s305
        %p307 = pneg %p108
        %p308 = pneg %p105
        %p309 = pneg %p129
        %p310 = pneg %p126
        %p311 = pneg %p155
        %p312 = pneg %p152
        %p313 = pneg %p181
        %p314 = pneg %p178
        %s315 = smul.u32 4, %s31
        %s316 = smul.u32 64, %s31
        %p317 = scmp.eq.s32.totalorder %s31, 0
        // Predicated region
        $region49: #{tpu_custom_call.1} parent=35 // pred_check
          %p318 = pneg %p317
        $region50: #{tpu_custom_call.1} parent=35 // pred_check_branch
          %320 = sbr.rel (%p318) target = $region52
        $region51: #{tpu_custom_call.1} parent=35 // pred_region
          %321 = vst [vmem:[#allocation2] sm:$0xff] 0.0
        $region52: #{tpu_custom_call.1} parent=35 // pred_fallthru
          _
        %v322 = vld [vmem:[#allocation2] sm:$0xff]
        %v323 = vld [vmem:[%s272] sm:$0xff]
        %v324 = vld [vmem:[%s272 + $0x8] sm:$0xff]
        %v325 = vld [vmem:[%s282] sm:$0xf]
        %v326 = vld [vmem:[%s282 + $0x4] sm:$0xf]
        %v327 = vld [vmem:[%s282 + $0x8] sm:$0xf]
        %v328 = vld [vmem:[%s282 + $0xc] sm:$0xf]
        %v329 = vld [vmem:[%s282 + $0x10] sm:$0xf]
        %v330 = vld [vmem:[%s282 + $0x14] sm:$0xf]
        %v331 = vld [vmem:[%s282 + $0x18] sm:$0xf]
        %v332 = vld [vmem:[%s282 + $0x1c] sm:$0xf]
        %v333 = vld [vmem:[%s282 + $0x20] sm:$0xf]
        %v334 = vld [vmem:[%s282 + $0x24] sm:$0xf]
        %v335 = vld [vmem:[%s282 + $0x28] sm:$0xf]
        %v336 = vld [vmem:[%s282 + $0x2c] sm:$0xf]
        %v337 = vld [vmem:[%s282 + $0x30] sm:$0xf]
        %v338 = vld [vmem:[%s282 + $0x34] sm:$0xf]
        %v339 = vld [vmem:[%s282 + $0x38] sm:$0xf]
        %v340 = vld [vmem:[%s282 + $0x3c] sm:$0xf]
        %v341 = vld [vmem:[%s282 + $0x40] sm:$0xf]
        %v342 = vld [vmem:[%s282 + $0x44] sm:$0xf]
        %v343 = vld [vmem:[%s282 + $0x48] sm:$0xf]
        %v344 = vld [vmem:[%s282 + $0x4c] sm:$0xf]
        %v345 = vld [vmem:[%s282 + $0x50] sm:$0xf]
        %v346 = vld [vmem:[%s282 + $0x54] sm:$0xf]
        %v347 = vld [vmem:[%s282 + $0x58] sm:$0xf]
        %v348 = vld [vmem:[%s282 + $0x5c] sm:$0xf]
        %v349 = vld [vmem:[%s282 + $0x60] sm:$0xf]
        %v350 = vld [vmem:[%s282 + $0x64] sm:$0xf]
        %v351 = vld [vmem:[%s282 + $0x68] sm:$0xf]
        %v352 = vld [vmem:[%s282 + $0x6c] sm:$0xf]
        %v353 = vld [vmem:[%s282 + $0x70] sm:$0xf]
        %v354 = vld [vmem:[%s282 + $0x74] sm:$0xf]
        %v355 = vld [vmem:[%s282 + $0x78] sm:$0xf]
        %v356 = vld [vmem:[%s282 + $0x7c] sm:$0xf]
        %v357 = vld [vmem:[%s282 + $0x80] sm:$0xf]
        %v358 = vld [vmem:[%s282 + $0x84] sm:$0xf]
        %v359 = vld [vmem:[%s282 + $0x88] sm:$0xf]
        %v360 = vld [vmem:[%s282 + $0x8c] sm:$0xf]
        %v361 = vld [vmem:[%s282 + $0x90] sm:$0xf]
        %v362 = vld [vmem:[%s282 + $0x94] sm:$0xf]
        %v363 = vld [vmem:[%s282 + $0x98] sm:$0xf]
        %v364 = vld [vmem:[%s282 + $0x9c] sm:$0xf]
        %v365 = vld [vmem:[%s282 + $0xa0] sm:$0xf]
        %v366 = vld [vmem:[%s282 + $0xa4] sm:$0xf]
        %v367 = vld [vmem:[%s282 + $0xa8] sm:$0xf]
        %v368 = vld [vmem:[%s282 + $0xac] sm:$0xf]
        %v369 = vld [vmem:[%s282 + $0xb0] sm:$0xf]
        %v370 = vld [vmem:[%s282 + $0xb4] sm:$0xf]
        %v371 = vld [vmem:[%s282 + $0xb8] sm:$0xf]
        %v372 = vld [vmem:[%s282 + $0xbc] sm:$0xf]
        %v373 = vld [vmem:[%s282 + $0xc0] sm:$0xf]
        %v374 = vld [vmem:[%s282 + $0xc4] sm:$0xf]
        %v375 = vld [vmem:[%s282 + $0xc8] sm:$0xf]
        %v376 = vld [vmem:[%s282 + $0xcc] sm:$0xf]
        %v377 = vld [vmem:[%s282 + $0xd0] sm:$0xf]
        %v378 = vld [vmem:[%s282 + $0xd4] sm:$0xf]
        %v379 = vld [vmem:[%s282 + $0xd8] sm:$0xf]
        %v380 = vld [vmem:[%s282 + $0xdc] sm:$0xf]
        %v381 = vld [vmem:[%s282 + $0xe0] sm:$0xf]
        %v382 = vld [vmem:[%s282 + $0xe4] sm:$0xf]
        %v383 = vld [vmem:[%s282 + $0xe8] sm:$0xf]
        %v384 = vld [vmem:[%s282 + $0xec] sm:$0xf]
        %v385 = vld [vmem:[%s282 + $0xf0] sm:$0xf]
        %v386 = vld [vmem:[%s282 + $0xf4] sm:$0xf]
        %v387 = vld [vmem:[%s282 + $0xf8] sm:$0xf]
        %v388 = vld [vmem:[%s282 + $0xfc] sm:$0xf]
        %v391 = vunpack.c.l.b16 %v323
        %v392 = vunpack.c.h.b16 %v323
        %v393 = vunpack.c.l.b16 %v324
        %v394 = vunpack.c.h.b16 %v324
        %v395 = vpack.c.b16 %v391, %v391
        %v396 = vpack.c.b16 %v392, %v392
        %v397 = vpack.c.b16 %v393, %v393
        %v398 = vpack.c.b16 %v394, %v394
        %v467 = vunpack.c.l.b16 %v325
        %v468 = vunpack.c.l.b16 %v326
        %v469 = vunpack.c.l.b16 %v327
        %v470 = vunpack.c.l.b16 %v328
        %v471 = vunpack.c.l.b16 %v329
        %v472 = vunpack.c.l.b16 %v330
        %v473 = vunpack.c.l.b16 %v331
        %v474 = vunpack.c.l.b16 %v332
        %v475 = vunpack.c.l.b16 %v333
        %v476 = vunpack.c.l.b16 %v334
        %v477 = vunpack.c.l.b16 %v335
        %v478 = vunpack.c.l.b16 %v336
        %v479 = vunpack.c.l.b16 %v337
        %v480 = vunpack.c.l.b16 %v338
        %v481 = vunpack.c.l.b16 %v339
        %v482 = vunpack.c.l.b16 %v340
        %v483 = vunpack.c.l.b16 %v341
        %v484 = vunpack.c.l.b16 %v342
        %v485 = vunpack.c.l.b16 %v343
        %v486 = vunpack.c.l.b16 %v344
        %v487 = vunpack.c.l.b16 %v345
        %v488 = vunpack.c.l.b16 %v346
        %v489 = vunpack.c.l.b16 %v347
        %v490 = vunpack.c.l.b16 %v348
        %v491 = vunpack.c.l.b16 %v349
        %v492 = vunpack.c.l.b16 %v350
        %v493 = vunpack.c.l.b16 %v351
        %v494 = vunpack.c.l.b16 %v352
        %v495 = vunpack.c.l.b16 %v353
        %v496 = vunpack.c.l.b16 %v354
        %v497 = vunpack.c.l.b16 %v355
        %v498 = vunpack.c.l.b16 %v356
        %v499 = vunpack.c.l.b16 %v357
        %v500 = vunpack.c.l.b16 %v358
        %v501 = vunpack.c.l.b16 %v359
        %v502 = vunpack.c.l.b16 %v360
        %v503 = vunpack.c.l.b16 %v361
        %v504 = vunpack.c.l.b16 %v362
        %v505 = vunpack.c.l.b16 %v363
        %v506 = vunpack.c.l.b16 %v364
        %v507 = vunpack.c.l.b16 %v365
        %v508 = vunpack.c.l.b16 %v366
        %v509 = vunpack.c.l.b16 %v367
        %v510 = vunpack.c.l.b16 %v368
        %v511 = vunpack.c.l.b16 %v369
        %v512 = vunpack.c.l.b16 %v370
        %v513 = vunpack.c.l.b16 %v371
        %v514 = vunpack.c.l.b16 %v372
        %v515 = vunpack.c.l.b16 %v373
        %v516 = vunpack.c.l.b16 %v374
        %v517 = vunpack.c.l.b16 %v375
        %v518 = vunpack.c.l.b16 %v376
        %v519 = vunpack.c.l.b16 %v377
        %v520 = vunpack.c.l.b16 %v378
        %v521 = vunpack.c.l.b16 %v379
        %v522 = vunpack.c.l.b16 %v380
        %v523 = vunpack.c.l.b16 %v381
        %v524 = vunpack.c.l.b16 %v382
        %v525 = vunpack.c.l.b16 %v383
        %v526 = vunpack.c.l.b16 %v384
        %v527 = vunpack.c.l.b16 %v385
        %v528 = vunpack.c.l.b16 %v386
        %v529 = vunpack.c.l.b16 %v387
        %v530 = vunpack.c.l.b16 %v388
        %v531 = vpack.c.b16 %v468, %v467
        %v532 = vpack.c.b16 %v470, %v469
        %v533 = vpack.c.b16 %v472, %v471
        %v534 = vpack.c.b16 %v474, %v473
        %v535 = vpack.c.b16 %v476, %v475
        %v536 = vpack.c.b16 %v478, %v477
        %v537 = vpack.c.b16 %v480, %v479
        %v538 = vpack.c.b16 %v482, %v481
        %v539 = vpack.c.b16 %v484, %v483
        %v540 = vpack.c.b16 %v486, %v485
        %v541 = vpack.c.b16 %v488, %v487
        %v542 = vpack.c.b16 %v490, %v489
        %v543 = vpack.c.b16 %v492, %v491
        %v544 = vpack.c.b16 %v494, %v493
        %v545 = vpack.c.b16 %v496, %v495
        %v546 = vpack.c.b16 %v498, %v497
        %v547 = vpack.c.b16 %v500, %v499
        %v548 = vpack.c.b16 %v502, %v501
        %v549 = vpack.c.b16 %v504, %v503
        %v550 = vpack.c.b16 %v506, %v505
        %v551 = vpack.c.b16 %v508, %v507
        %v552 = vpack.c.b16 %v510, %v509
        %v553 = vpack.c.b16 %v512, %v511
        %v554 = vpack.c.b16 %v514, %v513
        %v555 = vpack.c.b16 %v516, %v515
        %v556 = vpack.c.b16 %v518, %v517
        %v557 = vpack.c.b16 %v520, %v519
        %v558 = vpack.c.b16 %v522, %v521
        %v559 = vpack.c.b16 %v524, %v523
        %v560 = vpack.c.b16 %v526, %v525
        %v561 = vpack.c.b16 %v528, %v527
        %v562 = vpack.c.b16 %v530, %v529
        %595 = vmatpush.bf16.msra.mxu0 %v538
        %596 = vmatpush.bf16.msra.mxu0 %v537
        %597 = vmatpush.bf16.msra.mxu0 %v536
        %598 = vmatpush.bf16.msra.mxu0 %v535
        %599 = vmatpush.bf16.msra.mxu0 %v534
        %600 = vmatpush.bf16.msra.mxu0 %v533
        %601 = vmatpush.bf16.msra.mxu0 %v532
        %602 = vmatpush.bf16.msra.mxu0 %v531
        %603 = vmatmul.bf16.gmra.mxu0 %v395
        %v604 = vpop.f32.mrf.mxu0
        %v605 = vadd.f32 0.0, %v604
        %v606 = vpop.f32.mrf.mxu0
        %607 = vdwg.mxu0
        %608 = vmatpush.bf16.msra.mxu0 %v546
        %609 = vmatpush.bf16.msra.mxu0 %v545
        %610 = vmatpush.bf16.msra.mxu0 %v544
        %611 = vmatpush.bf16.msra.mxu0 %v543
        %612 = vmatpush.bf16.msra.mxu0 %v542
        %613 = vmatpush.bf16.msra.mxu0 %v541
        %614 = vmatpush.bf16.msra.mxu0 %v540
        %615 = vmatpush.bf16.msra.mxu0 %v539
        %616 = vmatmul.bf16.gmra.mxu0 %v396
        %v617 = vpop.f32.mrf.mxu0
        %v618 = vadd.f32 %v605, %v617
        %v619 = vpop.f32.mrf.mxu0
        %620 = vdwg.mxu0
        %621 = vmatpush.bf16.msra.mxu0 %v554
        %622 = vmatpush.bf16.msra.mxu0 %v553
        %623 = vmatpush.bf16.msra.mxu0 %v552
        %624 = vmatpush.bf16.msra.mxu0 %v551
        %625 = vmatpush.bf16.msra.mxu0 %v550
        %626 = vmatpush.bf16.msra.mxu0 %v549
        %627 = vmatpush.bf16.msra.mxu0 %v548
        %628 = vmatpush.bf16.msra.mxu0 %v547
        %629 = vmatmul.bf16.gmra.mxu0 %v397
        %v630 = vpop.f32.mrf.mxu0
        %v631 = vadd.f32 %v618, %v630
        %v632 = vpop.f32.mrf.mxu0
        %633 = vdwg.mxu0
        %634 = vmatpush.bf16.msra.mxu0 %v562
        %635 = vmatpush.bf16.msra.mxu0 %v561
        %636 = vmatpush.bf16.msra.mxu0 %v560
        %637 = vmatpush.bf16.msra.mxu0 %v559
        %638 = vmatpush.bf16.msra.mxu0 %v558
        %639 = vmatpush.bf16.msra.mxu0 %v557
        %640 = vmatpush.bf16.msra.mxu0 %v556
        %641 = vmatpush.bf16.msra.mxu0 %v555
        %642 = vmatmul.bf16.gmra.mxu0 %v398
        %v643 = vpop.f32.mrf.mxu0
        %v644 = vadd.f32 %v631, %v643
        %v645 = vpop.f32.mrf.mxu0
        %646 = vdwg.mxu0
        %v647 = vadd.f32 %v322, %v644
        %648 = vst [vmem:[#allocation2] sm:$0xff] %v647
        %p649 = scmp.eq.s32.totalorder %s31, 1
        // Predicated region
        $region53: #{tpu_custom_call.1} parent=35 // pred_check
          %p650 = pneg %p649
        $region54: #{tpu_custom_call.1} parent=35 // pred_check_branch
          %652 = sbr.rel (%p650) target = $region56
        $region55: #{tpu_custom_call.1} parent=35 // pred_region
          %v653 = vld [vmem:[#allocation2] sm:$0xff]
          %v654 = vmul.f32 %v653, %v653
          %655 = vadd.xlane.f32.xlu0 %v654
          %v656 = vpop.xlane.xlu0 %655
          %v657 = vmax.f32 %v656, 1e-30
          %v658 = vrsqrt.pop %v657
          %v659 = vmul.f32 %v658, %v657
          %v660 = vmul.f32 %v659, %v658
          %v661 = vmul.f32 0.5, %v660
          %v662 = vsub.f32 1.5, %v661
          %v663 = vmul.f32 %v658, %v662
          %vm664 = vweird.f32 %v657
          %vm665 = vweird.f32 %v658
          %vm666 = vmor %vm664, %vm665
          %v667 = vsel %vm666, %v658, %v663
          %v668 = vmul.f32 %v653, %v667
          %v669 = vpack.c.bf16 %v668, %v668
          %v670 = vld [vmem:[#allocation9] sm:$0xf]
          %v671 = vld [vmem:[#allocation9 + $0x4] sm:$0xf]
          %v672 = vld [vmem:[#allocation9 + $0x8] sm:$0xf]
          %v673 = vld [vmem:[#allocation9 + $0xc] sm:$0xf]
          %v674 = vld [vmem:[#allocation9 + $0x10] sm:$0xf]
          %v675 = vld [vmem:[#allocation9 + $0x14] sm:$0xf]
          %v676 = vld [vmem:[#allocation9 + $0x18] sm:$0xf]
          %v677 = vld [vmem:[#allocation9 + $0x1c] sm:$0xf]
          %v678 = vld [vmem:[#allocation9 + $0x20] sm:$0xf]
          %v679 = vld [vmem:[#allocation9 + $0x24] sm:$0xf]
          %v680 = vld [vmem:[#allocation9 + $0x28] sm:$0xf]
          %v681 = vld [vmem:[#allocation9 + $0x2c] sm:$0xf]
          %v682 = vld [vmem:[#allocation9 + $0x30] sm:$0xf]
          %v683 = vld [vmem:[#allocation9 + $0x34] sm:$0xf]
          %v684 = vld [vmem:[#allocation9 + $0x38] sm:$0xf]
          %v685 = vld [vmem:[#allocation9 + $0x3c] sm:$0xf]
          %v702 = vunpack.c.l.b16 %v670
          %v703 = vunpack.c.l.b16 %v671
          %v704 = vunpack.c.l.b16 %v672
          %v705 = vunpack.c.l.b16 %v673
          %v706 = vunpack.c.l.b16 %v674
          %v707 = vunpack.c.l.b16 %v675
          %v708 = vunpack.c.l.b16 %v676
          %v709 = vunpack.c.l.b16 %v677
          %v710 = vunpack.c.l.b16 %v678
          %v711 = vunpack.c.l.b16 %v679
          %v712 = vunpack.c.l.b16 %v680
          %v713 = vunpack.c.l.b16 %v681
          %v714 = vunpack.c.l.b16 %v682
          %v715 = vunpack.c.l.b16 %v683
          %v716 = vunpack.c.l.b16 %v684
          %v717 = vunpack.c.l.b16 %v685
          %v718 = vpack.c.b16 %v703, %v702
          %v719 = vpack.c.b16 %v705, %v704
          %v720 = vpack.c.b16 %v707, %v706
          %v721 = vpack.c.b16 %v709, %v708
          %v722 = vpack.c.b16 %v711, %v710
          %v723 = vpack.c.b16 %v713, %v712
          %v724 = vpack.c.b16 %v715, %v714
          %v725 = vpack.c.b16 %v717, %v716
          %734 = vmatpush.bf16.msra.mxu0 %v725
          %735 = vmatpush.bf16.msra.mxu0 %v724
          %736 = vmatpush.bf16.msra.mxu0 %v723
          %737 = vmatpush.bf16.msra.mxu0 %v722
          %738 = vmatpush.bf16.msra.mxu0 %v721
          %739 = vmatpush.bf16.msra.mxu0 %v720
          %740 = vmatpush.bf16.msra.mxu0 %v719
          %741 = vmatpush.bf16.msra.mxu0 %v718
          %742 = vmatmul.bf16.gmra.mxu0 %v669
          %v743 = vpop.f32.mrf.mxu0
          %v744 = vadd.f32 0.0, %v743
          %v745 = vpop.f32.mrf.mxu0
          %746 = vdwg.mxu0
          %s747 = sld [smem:[#allocation3]]
          %v748 = vstv %s747
          %v749 = vmul.f32 %v744, %v748
          %750 = vst [vmem:[#allocation10] sm:$0xff] %v749
          %751 = vst [vmem:[#allocation11] sm:$0xff] %v668
        $region56: #{tpu_custom_call.1} parent=35 // pred_fallthru
          _
        // Predicated region
        $region57: #{tpu_custom_call.1} parent=35 // pred_check
          %p752 = pneg %p152
        $region58: #{tpu_custom_call.1} parent=35 // pred_check_branch
          %754 = sbr.rel (%p752) target = $region60
        $region59: #{tpu_custom_call.1} parent=35 // pred_region
          %756 = vsyncadd [#allocation6], 0
          %s757 = smul.addr %s30, 8
          %s758 = scalar_lea.hbm %s4, %s757
          %s760 = sshll.u32 [#allocation10], 4
          %s761 = int_to_ptr.vmem [resolvable:$true] %s760
          %s762 = sshll.u32 %s758, 4
          %s763 = int_to_ptr.hbm [resolvable:$true] %s762
          %765 = dma.vmem_to_hbm [thread:$0]  %s761, 128, %s763, [#allocation6]
        $region60: #{tpu_custom_call.1} parent=35 // pred_fallthru
          _
        // Predicated region
        $region61: #{tpu_custom_call.1} parent=35 // pred_check
          %p766 = pneg %p178
        $region62: #{tpu_custom_call.1} parent=35 // pred_check_branch
          %768 = sbr.rel (%p766) target = $region64
        $region63: #{tpu_custom_call.1} parent=35 // pred_region
          %770 = vsyncadd [#allocation12], 0
          %s771 = smul.addr %s30, 8
          %s772 = scalar_lea.hbm %s5, %s771
          %s774 = sshll.u32 [#allocation11], 4
          %s775 = int_to_ptr.vmem [resolvable:$true] %s774
          %s776 = sshll.u32 %s772, 4
          %s777 = int_to_ptr.hbm [resolvable:$true] %s776
          %779 = dma.vmem_to_hbm [thread:$0]  %s775, 128, %s777, [#allocation12]
        $region64: #{tpu_custom_call.1} parent=35 // pred_fallthru
          _
        // Predicated region
        $region65: #{tpu_custom_call.1} parent=35 // pred_check
          %p780 = pneg %p152
        $region66: #{tpu_custom_call.1} parent=35 // pred_check_branch
          %782 = sbr.rel (%p780) target = $region68
        $region67: #{tpu_custom_call.1} parent=35 // pred_region
          %784 = dma.done [#allocation6], 128
        $region68: #{tpu_custom_call.1} parent=35 // pred_fallthru
          _
        // Predicated region
        $region69: #{tpu_custom_call.1} parent=35 // pred_check
          %p785 = pneg %p178
        $region70: #{tpu_custom_call.1} parent=35 // pred_check_branch
          %787 = sbr.rel (%p785) target = $region72
        $region71: #{tpu_custom_call.1} parent=35 // pred_region
          %789 = dma.done [#allocation12], 128
        $region72: #{tpu_custom_call.1} parent=35 // pred_fallthru
          _
      $region36: #{tpu_custom_call.1} parent=5 // pred_fallthru
        _
      %p790 = scmp.le.s32.totalorder 2, %s21
      // Predicated region
      $region73: #{tpu_custom_call.1} parent=5 // pred_check
        %p791 = pneg %p790
      $region74: #{tpu_custom_call.1} parent=5 // pred_check_branch
        %793 = sbr.rel (%p791) target = $region76
      $region75: #{tpu_custom_call.1} parent=5 // pred_region
        %s794 = ssub.s32 %s21, 2
      $region76: #{tpu_custom_call.1} parent=5 // pred_fallthru
        _
    $region6: #{tpu_custom_call.1} parent=1 // loop_footer
      %s25 = sadd.s32 1, %s21
    $region7: #{tpu_custom_call.1} parent=1 // loop_footer_branch
      %20 = sbr.rel target = $region3
    $region8: #{tpu_custom_call.1} parent=1 // loop_exit
      _
    %795 = vsyncpa [#allocation5], 1
    %s796 = scalar_lea.sflag [#allocation5], 1
    %797 = vsyncpa %s796, 1
    %798 = vsyncpa [#allocation8], 1
    %s799 = scalar_lea.sflag [#allocation8], 1
    %800 = vsyncpa %s799, 1
    %801 = vsyncpa [#allocation6], 1
    %s802 = scalar_lea.sflag [#allocation6], 1
    %803 = vsyncpa %s802, 1
    %804 = vsyncpa [#allocation12], 1

</llo_original>
